<compile_context>
chip_gen: v5e
topology: v5e:2x2
jax: 0.10.0
libtpu: 0.0.40
codegen_flags: <defaults>
</compile_context>

<pallas_src>
import numpy as np
import jax
import jax.numpy as jnp
from jax import lax
from jax.experimental import pallas as pl
from jax.experimental.pallas import tpu as pltpu


_LANE = 128
_MAX_TILE_ROWS = 4096   # rows of 128 f32 lanes per buffer -> 2 MiB per buffer


# ----------------------------------------------------------------------------
# Pallas kernel: k-space data-consistency blend on one re/im plane tile
#   k_dc = A_x + (1 - w) * mask * (y - A_x)
# ----------------------------------------------------------------------------
def _dc_kernel(w_ref, ax_ref, y_ref, m_ref, o_ref):
    s = 1.0 - w_ref[0]                     # scalar weight from SMEM
    ax = ax_ref[...]                       # (1, T, 128)
    o_ref[...] = ax + (s * m_ref[...]) * (y_ref[...] - ax)


def _choose_tile_rows(rows):
    """>= 2 row tiles when possible (v7x megacore), multiple of 8, capped."""
    if rows < 16:
        return rows                        # tiny input: one (8,128)-legal block
    half = -(-rows // 2)                   # cdiv(rows, 2)
    half = ((half + 7) // 8) * 8           # sublane rule: multiple of 8
    return min(_MAX_TILE_ROWS, half)


def _dc_combine(weight, ax_ri, y_ri, m):
    """Fused DC blend.

    ax_ri / y_ri: (2, *S) f32 re/im planes.  m: (*S,) f32 (one value per
    complex sample; duplicated across the plane grid axis inside the kernel
    via the mask index_map).  Returns (2, *S) f32.
    """
    s = m.shape
    n = int(np.prod(s))                    # number of complex samples
    pad = (-n) % _LANE                     # rare fallback for n % 128 != 0
    rows = (n + pad) // _LANE

    axf = ax_ri.reshape(2, n)
    yf = y_ri.reshape(2, n)
    mf = m.reshape(n)
    if pad:                                # zero-padded tail is inert, sliced off
        axf = jnp.pad(axf, ((0, 0), (0, pad)))
        yf = jnp.pad(yf, ((0, 0), (0, pad)))
        mf = jnp.pad(mf, (0, pad))
    ax3 = axf.reshape(2, rows, _LANE)
    y3 = yf.reshape(2, rows, _LANE)
    m2 = mf.reshape(rows, _LANE)

    tile_rows = _choose_tile_rows(rows)
    grid = (pl.cdiv(rows, tile_rows), 2)   # (row tiles, re/im plane); plane innermost

    data_spec = pl.BlockSpec((1, tile_rows, _LANE), lambda i, p: (p, i, 0))
    mask_spec = pl.BlockSpec((tile_rows, _LANE), lambda i, p: (i, 0))  # ignores p

    out = pl.pallas_call(
        _dc_kernel,
        out_shape=jax.ShapeDtypeStruct((2, rows, _LANE), jnp.float32),
        grid=grid,
        in_specs=[
            pl.BlockSpec(memory_space=pltpu.MemorySpace.SMEM),   # scalar weight
            data_spec, data_spec, mask_spec,
        ],
        out_specs=data_spec,
        input_output_aliases={1: 0},       # reuse the A_x slab's HBM buffer
        compiler_params=pltpu.CompilerParams(
            dimension_semantics=("parallel", "arbitrary"),
            vmem_limit_bytes=40 * 1024 * 1024),
    )(weight, ax3, y3, m2)

    outf = out.reshape(2, rows * _LANE)
    if pad:
        outf = outf[:, :n]
    return outf.reshape((2,) + s)


# ----------------------------------------------------------------------------
# FFT glue (merlinth.layers.fft2 / fft2c equivalents, ortho norm)
# ----------------------------------------------------------------------------
def _fft2(x):
    return jnp.fft.fft2(x, norm="ortho")


def _ifft2(k):
    return jnp.fft.ifft2(k, norm="ortho")


def _fft2c(x):
    ax = (-2, -1)
    return jnp.fft.fftshift(
        jnp.fft.fft2(jnp.fft.ifftshift(x, axes=ax), norm="ortho"), axes=ax)


def _ifft2c(k):
    ax = (-2, -1)
    return jnp.fft.fftshift(
        jnp.fft.ifft2(jnp.fft.ifftshift(k, axes=ax), norm="ortho"), axes=ax)


# ----------------------------------------------------------------------------
# SingleCoilProxLayer forward
# ----------------------------------------------------------------------------
def single_coil_prox_forward(weight_param, x, y, mask, *,
                             weight_scale=1.0, center=True):
    """Port of SingleCoilProxLayer.forward([x, y, mask])."""
    w = (jnp.asarray(weight_param, jnp.float32) * weight_scale).reshape(1)
    fft, ifft = (_fft2c, _ifft2c) if center else (_fft2, _ifft2)

    A_x = fft(x)
    # complex64 -> separate re/im planes (one fused XLA pass each; see TODO).
    ax_ri = jnp.stack([jnp.real(A_x), jnp.imag(A_x)], axis=0).astype(jnp.float32)
    y_ri = jnp.stack([jnp.real(y), jnp.imag(y)], axis=0).astype(jnp.float32)
    # Mask stays at its natural (one value per complex sample) size; no-op when
    # shapes already match.
    m = jnp.broadcast_to(mask.astype(jnp.float32), A_x.shape)

    k_ri = _dc_combine(w, ax_ri, y_ri, m)
    k_dc = lax.complex(k_ri[0], k_ri[1])
    return ifft(k_dc)


# Pure-JAX reference mirroring the PyTorch forward exactly.
def single_coil_prox_ref(weight_param, x, y, mask, *,
                         weight_scale=1.0, center=True):
    w = weight_param[0] * weight_scale
    fft, ifft = (_fft2c, _ifft2c) if center else (_fft2, _ifft2)
    A_x = fft(x)
    k_dc = (1.0 - mask) * A_x + mask * (w * A_x + (1.0 - w) * y)
    return ifft(k_dc)


if __name__ == "__main__":
    # single-coil complex NCHW: (B, 1, H, W)
    B, C, H, W = 2, 1, 16, 16
    key = jax.random.PRNGKey(0)
    kxr, kxi, kyr, kyi, km = jax.random.split(key, 5)

    x = lax.complex(jax.random.normal(kxr, (B, C, H, W), jnp.float32),
                    jax.random.normal(kxi, (B, C, H, W), jnp.float32))
    y = lax.complex(jax.random.normal(kyr, (B, C, H, W), jnp.float32),
                    jax.random.normal(kyi, (B, C, H, W), jnp.float32))
    mask = (jax.random.uniform(km, (B, C, H, W)) > 0.5).astype(jnp.float32)

    # module defaults: weight_init=0.1, weight_scale=1.0, center=True
    weight = jnp.array([0.1], jnp.float32)

    run = jax.jit(lambda w_, x_, y_, m_: single_coil_prox_forward(
        w_, x_, y_, m_, weight_scale=1.0, center=True))
    out = jax.block_until_ready(run(weight, x, y, mask))

    ref = single_coil_prox_ref(weight, x, y, mask,
                               weight_scale=1.0, center=True)
    np.testing.assert_allclose(np.asarray(out), np.asarray(ref),
                               atol=1e-4, rtol=1e-4)
    print("KERNEL_OK")
</pallas_src>

<mosaic_0001>
module attributes {stable_mosaic.version = 11 : i64} {
  func.func @_dc_kernel(%arg0: i32, %arg1: i32, %arg2: memref<1xf32, #tpu.memory_space<smem>>, %arg3: memref<1x4x128xf32, #tpu.memory_space<vmem>>, %arg4: memref<1x4x128xf32, #tpu.memory_space<vmem>>, %arg5: memref<4x128xf32, #tpu.memory_space<vmem>>, %arg6: memref<1x4x128xf32, #tpu.memory_space<vmem>>) attributes {dimension_semantics = [#tpu.dimension_semantics<parallel>, #tpu.dimension_semantics<arbitrary>], iteration_bounds = array<i64: 1, 2>, scalar_prefetch = 0 : i64, scratch_operands = 0 : i64, tpu.core_type = #tpu.core_type<tc>, window_params = [{transform_indices = @transform_0, window_bounds = array<i64: 1>}, {transform_indices = @transform_1, window_bounds = array<i64: 1, 4, 128>}, {transform_indices = @transform_2, window_bounds = array<i64: 1, 4, 128>}, {transform_indices = @transform_3, window_bounds = array<i64: 4, 128>}, {transform_indices = @transform_4, window_bounds = array<i64: 1, 4, 128>}]} {
    %c0 = arith.constant 0 : index
    %0 = memref.load %arg2[%c0] : memref<1xf32, #tpu.memory_space<smem>>
    %cst = arith.constant 1.000000e+00 : f32
    %1 = arith.subf %cst, %0 : f32
    %c0_0 = arith.constant 0 : index
    %c0_1 = arith.constant 0 : index
    %c0_2 = arith.constant 0 : index
    %2 = vector.load %arg3[%c0_0, %c0_1, %c0_2] : memref<1x4x128xf32, #tpu.memory_space<vmem>>, vector<1x4x128xf32>
    %c0_3 = arith.constant 0 : index
    %c0_4 = arith.constant 0 : index
    %3 = vector.load %arg5[%c0_3, %c0_4] : memref<4x128xf32, #tpu.memory_space<vmem>>, vector<4x128xf32>
    %4 = vector.broadcast %1 : f32 to vector<4x128xf32>
    %5 = arith.mulf %4, %3 : vector<4x128xf32>
    %c0_5 = arith.constant 0 : index
    %c0_6 = arith.constant 0 : index
    %c0_7 = arith.constant 0 : index
    %6 = vector.load %arg4[%c0_5, %c0_6, %c0_7] : memref<1x4x128xf32, #tpu.memory_space<vmem>>, vector<1x4x128xf32>
    %7 = arith.subf %6, %2 : vector<1x4x128xf32>
    %8 = vector.shape_cast %5 : vector<4x128xf32> to vector<1x4x128xf32>
    %9 = arith.mulf %8, %7 : vector<1x4x128xf32>
    %10 = arith.addf %2, %9 : vector<1x4x128xf32>
    %c0_8 = arith.constant 0 : index
    %c0_9 = arith.constant 0 : index
    %c0_10 = arith.constant 0 : index
    %11 = vector.load %arg6[%c0_8, %c0_9, %c0_10] : memref<1x4x128xf32, #tpu.memory_space<vmem>>, vector<1x4x128xf32>
    tpu.vector_store %arg6[%c0_8, %c0_9, %c0_10], %10 {strides = array<i32>} : memref<1x4x128xf32, #tpu.memory_space<vmem>>, vector<1x4x128xf32>,
    return
  }
  func.func @transform_0(%arg0: i32, %arg1: i32) -> i32 {
    %c0_i32 = arith.constant 0 : i32
    %c0_i32_0 = arith.constant 0 : i32
    return %c0_i32 : i32
  }
  func.func @transform_1(%arg0: i32, %arg1: i32) -> (i32, i32, i32) {
    %c0_i32 = arith.constant 0 : i32
    %c0_i32_0 = arith.constant 0 : i32
    return %arg1, %arg0, %c0_i32 : i32, i32, i32
  }
  func.func @transform_2(%arg0: i32, %arg1: i32) -> (i32, i32, i32) {
    %c0_i32 = arith.constant 0 : i32
    %c0_i32_0 = arith.constant 0 : i32
    return %arg1, %arg0, %c0_i32 : i32, i32, i32
  }
  func.func @transform_3(%arg0: i32, %arg1: i32) -> (i32, i32) {
    %c0_i32 = arith.constant 0 : i32
    %c0_i32_0 = arith.constant 0 : i32
    return %arg0, %c0_i32 : i32, i32
  }
  func.func @transform_4(%arg0: i32, %arg1: i32) -> (i32, i32, i32) {
    %c0_i32 = arith.constant 0 : i32
    %c0_i32_0 = arith.constant 0 : i32
    return %arg1, %arg0, %c0_i32 : i32, i32, i32
  }
}

</mosaic_0001>

<llo_original>
// kernel: custom-call.1
$region0: #{custom-call.1}
  %s0 = inlined_call_operand.vmem [shape: c64[2,1,16,16], index: 0, kind: input, shape index: {}]
  %s1 = inlined_call_operand.vmem [shape: f32[2,1,16,16], index: 1, kind: output, shape index: {}]
  %s2 = scalar_lea.vmem %s0, 32
  %v3 = vld [vmem:[%s2] sm:$0xff]
  %4 = vst [vmem:[%s1] sm:$0xff] %v3
  %s5 = scalar_lea.vmem %s1, 8
  %s6 = scalar_lea.vmem %s2, 8
  %v7 = vld [vmem:[%s6] sm:$0xff]
  %8 = vst [vmem:[%s5] sm:$0xff] %v7
  %s9 = scalar_lea.vmem %s1, 16
  %s10 = scalar_lea.vmem %s2, 16
  %v11 = vld [vmem:[%s10] sm:$0xff]
  %12 = vst [vmem:[%s9] sm:$0xff] %v11
  %s13 = scalar_lea.vmem %s1, 24
  %s14 = scalar_lea.vmem %s2, 24
  %v15 = vld [vmem:[%s14] sm:$0xff]
  %16 = vst [vmem:[%s13] sm:$0xff] %v15

// kernel: custom-call
$region0: #{custom-call}
  %s0 = inlined_call_operand.vmem [shape: c64[2,1,16,16], index: 0, kind: input, shape index: {}]
  %s1 = inlined_call_operand.vmem [shape: f32[2,1,16,16], index: 1, kind: output, shape index: {}]
  %v2 = vld [vmem:[%s0] sm:$0xff]
  %3 = vst [vmem:[%s1] sm:$0xff] %v2
  %s4 = scalar_lea.vmem %s1, 8
  %s5 = scalar_lea.vmem %s0, 8
  %v6 = vld [vmem:[%s5] sm:$0xff]
  %7 = vst [vmem:[%s4] sm:$0xff] %v6
  %s8 = scalar_lea.vmem %s1, 16
  %s9 = scalar_lea.vmem %s0, 16
  %v10 = vld [vmem:[%s9] sm:$0xff]
  %11 = vst [vmem:[%s8] sm:$0xff] %v10
  %s12 = scalar_lea.vmem %s1, 24
  %s13 = scalar_lea.vmem %s0, 24
  %v14 = vld [vmem:[%s13] sm:$0xff]
  %15 = vst [vmem:[%s12] sm:$0xff] %v14

// kernel: custom-call.2
$region0: #{custom-call.2}
  %s0 = inlined_call_operand.hbm [shape: c64[2,1,16,16], index: 0, kind: input, shape index: {}]
  %s1 = inlined_call_operand.vmem [shape: f32[2,1,16,16], index: 1, kind: output, shape index: {}]
  $region1: #{custom-call.2} parent=0
    #allocation0 [shape = 's32[1]{0}', space=sflag, size = 0x4, scoped, tag = 'scoped memory for custom-call.2']
    %2 = vsyncpa [#allocation0], 0
    %s4 = sshll.u32 %s0, 4
    %s5 = int_to_ptr.hbm [resolvable:$true] %s4
    %s6 = sshll.u32 %s1, 4
    %s7 = int_to_ptr.vmem [resolvable:$true] %s6
    %9 = dma.hbm_to_vmem [thread:$0]  %s5, 512, %s7, [#allocation0]
    %11 = dma.done [#allocation0], 512
    %12 = vsyncpa [#allocation0], 1

// kernel: custom-call.3
$region0: #{custom-call.3}
  %s0 = inlined_call_operand.hbm [shape: c64[2,1,16,16], index: 0, kind: input, shape index: {}]
  %s1 = inlined_call_operand.vmem [shape: f32[2,1,16,16], index: 1, kind: output, shape index: {}]
  %s2 = scalar_lea.hbm %s0, 32
  $region1: #{custom-call.3} parent=0
    #allocation0 [shape = 's32[1]{0}', space=sflag, size = 0x4, scoped, tag = 'scoped memory for custom-call.3']
    %3 = vsyncpa [#allocation0], 0
    %s5 = sshll.u32 %s2, 4
    %s6 = int_to_ptr.hbm [resolvable:$true] %s5
    %s7 = sshll.u32 %s1, 4
    %s8 = int_to_ptr.vmem [resolvable:$true] %s7
    %10 = dma.hbm_to_vmem [thread:$0]  %s6, 512, %s8, [#allocation0]
    %12 = dma.done [#allocation0], 512
    %13 = vsyncpa [#allocation0], 1

// kernel: squeeze.2
$region0: #{squeeze.2}
  %s0 = inlined_call_operand.vmem [shape: f32[1,4,128], index: 0, kind: input, shape index: {}]
  %s1 = inlined_call_operand.vmem [shape: f32[2,1,16,16], index: 1, kind: output, shape index: {}]
  $region1: #{squeeze.2} parent=0
    #allocation0 [shape = 'u8[4096]{0}', space=vmem, size = 0x1000, scoped, tag = 'scoped mem for input reshape']
    %s3 = ssub.s32 16, 1
    %v4 = vld [vmem:[%s0] sm:%s3]
    %5 = vst [vmem:[#allocation0] sm:%s3] %v4
    %v6 = vld [vmem:[#allocation0] sm:$0xf]
    %vm7 = vcmask 130048
    %8 = vst.msk [vmem:[%s1] ss:$8 sm:$0xf] %vm7, %v6
    %v9 = vld [vmem:[#allocation0] sm:$0xf]
    %10 = vrot.lane.b32.xlu0 %v9, 112
    %v11 = vpop.permute.xlu0 %10
    %vm12 = vcmask 130048
    %s13 = scalar_lea.vmem %s1, 1
    %14 = vst.msk [vmem:[%s13] ss:$8 sm:$0xf] %vm12, %v11
    %v15 = vld [vmem:[#allocation0] sm:$0xf]
    %16 = vrot.lane.b32.xlu0 %v15, 96
    %v17 = vpop.permute.xlu0 %16
    %vm18 = vcmask 130048
    %s19 = scalar_lea.vmem %s1, 2
    %20 = vst.msk [vmem:[%s19] ss:$8 sm:$0xf] %vm18, %v17
    %v21 = vld [vmem:[#allocation0] sm:$0xf]
    %22 = vrot.lane.b32.xlu0 %v21, 80
    %v23 = vpop.permute.xlu0 %22
    %vm24 = vcmask 130048
    %s25 = scalar_lea.vmem %s1, 3
    %26 = vst.msk [vmem:[%s25] ss:$8 sm:$0xf] %vm24, %v23
    %v27 = vld [vmem:[#allocation0] sm:$0xf]
    %28 = vrot.lane.b32.xlu0 %v27, 64
    %v29 = vpop.permute.xlu0 %28
    %vm30 = vcmask 130048
    %s31 = scalar_lea.vmem %s1, 4
    %32 = vst.msk [vmem:[%s31] ss:$8 sm:$0xf] %vm30, %v29
    %v33 = vld [vmem:[#allocation0] sm:$0xf]
    %34 = vrot.lane.b32.xlu0 %v33, 48
    %v35 = vpop.permute.xlu0 %34
    %vm36 = vcmask 130048
    %s37 = scalar_lea.vmem %s1, 5
    %38 = vst.msk [vmem:[%s37] ss:$8 sm:$0xf] %vm36, %v35
    %v39 = vld [vmem:[#allocation0] sm:$0xf]
    %40 = vrot.lane.b32.xlu0 %v39, 32
    %v41 = vpop.permute.xlu0 %40
    %vm42 = vcmask 130048
    %s43 = scalar_lea.vmem %s1, 6
    %44 = vst.msk [vmem:[%s43] ss:$8 sm:$0xf] %vm42, %v41
    %v45 = vld [vmem:[#allocation0] sm:$0xf]
    %46 = vrot.lane.b32.xlu0 %v45, 16
    %v47 = vpop.permute.xlu0 %46
    %vm48 = vcmask 130048
    %s49 = scalar_lea.vmem %s1, 7
    %50 = vst.msk [vmem:[%s49] ss:$8 sm:$0xf] %vm48, %v47

// kernel: custom-call.4
$region0: #{custom-call.4}
  %s0 = inlined_call_operand.vmem [shape: f32[2,1,16,16], index: 0, kind: input, shape index: {}]
  %s1 = inlined_call_operand.vmem [shape: f32[2,1,16,16], index: 1, kind: input, shape index: {}]
  %s2 = inlined_call_operand.hbm [shape: c64[2,1,16,16], index: 2, kind: output, shape index: {}]
  %s3 = scalar_lea.hbm %s2, 32
  $region1: #{custom-call.4} parent=0
    #allocation0 [shape = 's32[1]{0}', space=sflag, size = 0x4, scoped, tag = 'scoped memory for custom-call.4']
    %4 = vsyncpa [#allocation0], 0
    %s6 = sshll.u32 %s0, 4
    %s7 = int_to_ptr.vmem [resolvable:$true] %s6
    %s8 = sshll.u32 %s2, 4
    %s9 = int_to_ptr.hbm [resolvable:$true] %s8
    %11 = dma.vmem_to_hbm [thread:$0]  %s7, 512, %s9, [#allocation0]
    %13 = dma.done [#allocation0], 512
    %14 = vsyncpa [#allocation0], 1
  $region2: #{custom-call.4} parent=0
    #allocation1 [shape = 's32[1]{0}', space=sflag, size = 0x4, scoped, tag = 'scoped memory for custom-call.4']
    %15 = vsyncpa [#allocation1], 0
    %s17 = sshll.u32 %s1, 4
    %s18 = int_to_ptr.vmem [resolvable:$true] %s17
    %s19 = sshll.u32 %s3, 4
    %s20 = int_to_ptr.hbm [resolvable:$true] %s19
    %22 = dma.vmem_to_hbm [thread:$0]  %s18, 512, %s20, [#allocation1]
    %24 = dma.done [#allocation1], 512
    %25 = vsyncpa [#allocation1], 1

// kernel: _lambda_.1
$region0: #{_lambda_.1}
  #allocation0 [shape = 'u32[]', space=smem, size = 0x4, offset = 0x4, fixed_abs, tag = 'smem constant byte address 0x4 - core index']
  #allocation1 [shape = 'u32[72,128]{1,0:T(1,128)}', space=vmem, size = 0x9000, scoped, tag = 'internal scratch']
  #allocation2 [shape = 'f32[1]{0:T(128)S(6)}', space=smem, size = 0x200, scoped, tag = 'scoped memory for _lambda_.1']
  %s0 = inlined_call_operand.<no memory space> [shape: f32[1], index: 0, kind: input, shape index: {}]
  %s1 = inlined_call_operand.vmem [shape: f32[2,4,128], index: 1, kind: input, shape index: {}, may-alias: {1,4}]
  %s2 = inlined_call_operand.vmem [shape: f32[2,4,128], index: 2, kind: input, shape index: {}]
  %s3 = inlined_call_operand.vmem [shape: f32[4,128], index: 3, kind: input, shape index: {}]
  %s4 = inlined_call_operand.vmem [shape: f32[2,4,128], index: 4, kind: output, shape index: {}, may-alias: {1,4}]
  %s5 = sld [smem:[#allocation0]]
  $region49: #{_lambda_.1} parent=0
    _
  %s7 = ssub.s32 1, %s5
  %s8 = scalar_select 0, %s7, %s5
  %9 = sst [smem:[#allocation2]] %s0
  loop: start=0, step=1, limit=4
  $region2: #{_lambda_.1} parent=0 // loop_pre_header
    _
  $region3: #{_lambda_.1} parent=0 // loop_header
    %s11 = sphi 0, %s15
    %p12 = scmp.ge.s32.totalorder %s11, 4
    %s18 = sphi 0, %s30
    %s19 = sphi 0, %s26
    %s20 = sphi 0, %s18
    %s21 = sphi 0, %s19
    %s22 = sphi 0, %s20
    %s23 = sphi 0, %s21
    %s31 = sphi 0, %s31
    %s33 = sphi 0, %s31
    %s34 = sphi 0, %s33
    %s48 = sphi 0, %s34
    %s56 = sphi 0, %s58
    %s59 = sphi 0, %s56
    %s60 = sphi 0, %s59
    %s76 = sphi 0, %s60
    %s84 = sphi 0, %s86
    %s87 = sphi 0, %s84
    %s88 = sphi 0, %s87
    %s104 = sphi 0, %s88
    %s110 = sphi 0, %s112
    %s113 = sphi 0, %s110
    %s114 = sphi 0, %s113
    %s130 = sphi 0, %s114
    %s138 = sphi 0, %s140
    %s141 = sphi 0, %s138
    %s142 = sphi 0, %s141
    %s158 = sphi 0, %s142
  $region4: #{_lambda_.1} parent=0 // loop_header_branch
    %14 = sbr.rel (%p12) target = $region8
  $region5: #{_lambda_.1} parent=0 // loop_body
    %s16 = ssub.s32 %s11, 1
    %s17 = ssub.s32 %s11, 2
    %s24 = sadd.s32 1, %s19
    %p25 = scmp.ge.s32.totalorder %s24, 2
    %s26 = scalar_select %p25, 0, %s24
    %s27 = sadd.s32 1, %s18
    %s28 = scalar_select %p25, %s27, %s18
    %p29 = scmp.ge.s32.totalorder %s28, 1
    %s30 = scalar_select %p29, 0, %s28
    %s32 = sadd.s32 %s31, 1
    %p35 = scmp.eq.s32.totalorder %s11, 1
    %p36 = scmp.ne.s32.totalorder %s31, %s33
    %p37 = scmp.eq.s32.totalorder %s11, 0
    %p38 = por %p36, %p37
    %p39 = scmp.ne.s32.totalorder %s31, %s33
    %p40 = scmp.eq.s32.totalorder %s16, 1
    %p41 = por %p39, %p40
    %p42 = scmp.ne.s32.totalorder %s33, %s34
    %p43 = scmp.eq.s32.totalorder %s16, 0
    %p44 = por %p42, %p43
    %p45 = scmp.ne.s32.totalorder %s33, %s34
    %p46 = scmp.eq.s32.totalorder %s17, 1
    %p47 = por %p45, %p46
    %p49 = scmp.ne.s32.totalorder %s34, %s48
    %p50 = scmp.eq.s32.totalorder %s17, 0
    %p51 = por %p49, %p50
    %s52 = ssub.s32 %s19, %s26
    %s53 = ssub.s32 %s18, %s30
    %s54 = sor.u32 %s52, %s53
    %p55 = scmp.eq.s32.totalorder %s54, 0
    %s57 = sadd.s32 %s56, 1
    %s58 = scalar_select %p55, %s56, %s57
    %p61 = pneg %p55
    %p62 = scmp.eq.s32.totalorder %s11, 1
    %p63 = por %p61, %p62
    %p64 = scmp.ne.s32.totalorder %s56, %s59
    %p65 = scmp.eq.s32.totalorder %s11, 0
    %p66 = por %p64, %p65
    %p67 = scmp.ne.s32.totalorder %s56, %s59
    %p68 = scmp.eq.s32.totalorder %s16, 1
    %p69 = por %p67, %p68
    %p70 = scmp.ne.s32.totalorder %s59, %s60
    %p71 = scmp.eq.s32.totalorder %s16, 0
    %p72 = por %p70, %p71
    %p73 = scmp.ne.s32.totalorder %s59, %s60
    %p74 = scmp.eq.s32.totalorder %s17, 1
    %p75 = por %p73, %p74
    %p77 = scmp.ne.s32.totalorder %s60, %s76
    %p78 = scmp.eq.s32.totalorder %s17, 0
    %p79 = por %p77, %p78
    %s80 = ssub.s32 %s19, %s26
    %s81 = ssub.s32 %s18, %s30
    %s82 = sor.u32 %s80, %s81
    %p83 = scmp.eq.s32.totalorder %s82, 0
    %s85 = sadd.s32 %s84, 1
    %s86 = scalar_select %p83, %s84, %s85
    %p89 = pneg %p83
    %p90 = scmp.eq.s32.totalorder %s11, 1
    %p91 = por %p89, %p90
    %p92 = scmp.ne.s32.totalorder %s84, %s87
    %p93 = scmp.eq.s32.totalorder %s11, 0
    %p94 = por %p92, %p93
    %p95 = scmp.ne.s32.totalorder %s84, %s87
    %p96 = scmp.eq.s32.totalorder %s16, 1
    %p97 = por %p95, %p96
    %p98 = scmp.ne.s32.totalorder %s87, %s88
    %p99 = scmp.eq.s32.totalorder %s16, 0
    %p100 = por %p98, %p99
    %p101 = scmp.ne.s32.totalorder %s87, %s88
    %p102 = scmp.eq.s32.totalorder %s17, 1
    %p103 = por %p101, %p102
    %p105 = scmp.ne.s32.totalorder %s88, %s104
    %p106 = scmp.eq.s32.totalorder %s17, 0
    %p107 = por %p105, %p106
    %s108 = ssub.s32 %s18, %s30
    %p109 = scmp.eq.s32.totalorder %s108, 0
    %s111 = sadd.s32 %s110, 1
    %s112 = scalar_select %p109, %s110, %s111
    %p115 = pneg %p109
    %p116 = scmp.eq.s32.totalorder %s11, 1
    %p117 = por %p115, %p116
    %p118 = scmp.ne.s32.totalorder %s110, %s113
    %p119 = scmp.eq.s32.totalorder %s11, 0
    %p120 = por %p118, %p119
    %p121 = scmp.ne.s32.totalorder %s110, %s113
    %p122 = scmp.eq.s32.totalorder %s16, 1
    %p123 = por %p121, %p122
    %p124 = scmp.ne.s32.totalorder %s113, %s114
    %p125 = scmp.eq.s32.totalorder %s16, 0
    %p126 = por %p124, %p125
    %p127 = scmp.ne.s32.totalorder %s113, %s114
    %p128 = scmp.eq.s32.totalorder %s17, 1
    %p129 = por %p127, %p128
    %p131 = scmp.ne.s32.totalorder %s114, %s130
    %p132 = scmp.eq.s32.totalorder %s17, 0
    %p133 = por %p131, %p132
    %s134 = ssub.s32 %s19, %s26
    %s135 = ssub.s32 %s18, %s30
    %s136 = sor.u32 %s134, %s135
    %p137 = scmp.eq.s32.totalorder %s136, 0
    %s139 = sadd.s32 %s138, 1
    %s140 = scalar_select %p137, %s138, %s139
    %p143 = pneg %p137
    %p144 = scmp.eq.s32.totalorder %s11, 1
    %p145 = por %p143, %p144
    %p146 = scmp.ne.s32.totalorder %s138, %s141
    %p147 = scmp.eq.s32.totalorder %s11, 0
    %p148 = por %p146, %p147
    %p149 = scmp.ne.s32.totalorder %s138, %s141
    %p150 = scmp.eq.s32.totalorder %s16, 1
    %p151 = por %p149, %p150
    %p152 = scmp.ne.s32.totalorder %s141, %s142
    %p153 = scmp.eq.s32.totalorder %s16, 0
    %p154 = por %p152, %p153
    %p155 = scmp.ne.s32.totalorder %s141, %s142
    %p156 = scmp.eq.s32.totalorder %s17, 1
    %p157 = por %p155, %p156
    %p159 = scmp.ne.s32.totalorder %s142, %s158
    %p160 = scmp.eq.s32.totalorder %s17, 0
    %p161 = por %p159, %p160
    %p162 = scmp.le.s32.totalorder 1, %s11
    %p163 = scmp.lt.s32.totalorder %s11, 3
    %p164 = pnand %p162, %p163
    %p165 = pneg %p164
    // Predicated region
    $region9: #{_lambda_.1} parent=5 // pred_check
      _
    $region10: #{_lambda_.1} parent=5 // pred_check_branch
      %167 = sbr.rel (%p164) target = $region12
    $region11: #{_lambda_.1} parent=5 // pred_region
      %s168 = ssub.s32 %s11, 1
      // Predicated region
      $region13: #{_lambda_.1} parent=11 // pred_check
        %p169 = pneg %p44
      $region14: #{_lambda_.1} parent=11 // pred_check_branch
        %171 = sbr.rel (%p169) target = $region16
      $region15: #{_lambda_.1} parent=11 // pred_region
        _
      $region16: #{_lambda_.1} parent=11 // pred_fallthru
        _
      // Predicated region
      $region17: #{_lambda_.1} parent=11 // pred_check
        %p172 = pneg %p126
      $region18: #{_lambda_.1} parent=11 // pred_check_branch
        %174 = sbr.rel (%p172) target = $region20
      $region19: #{_lambda_.1} parent=11 // pred_region
        %p175 = scmp.lt.s32.totalorder %s20, 0
        %s176 = scalar_select %p175, %s20, 0
        %s177 = smul.addr %s176, 4
        %s178 = scalar_lea.vmem %s3, %s177
      $region20: #{_lambda_.1} parent=11 // pred_fallthru
        _
    $region12: #{_lambda_.1} parent=5 // pred_fallthru
      _
    %p179 = scmp.lt.s32.totalorder %s11, 2
    // Predicated region
    $region21: #{_lambda_.1} parent=5 // pred_check
      %p180 = pneg %p179
    $region22: #{_lambda_.1} parent=5 // pred_check_branch
      %182 = sbr.rel (%p180) target = $region24
    $region23: #{_lambda_.1} parent=5 // pred_region
      // Predicated region
      $region25: #{_lambda_.1} parent=23 // pred_check
        %p183 = pneg %p66
      $region26: #{_lambda_.1} parent=23 // pred_check_branch
        %185 = sbr.rel (%p183) target = $region28
      $region27: #{_lambda_.1} parent=23 // pred_region
        %p186 = scmp.lt.s32.totalorder %s19, 1
        %s187 = scalar_select %p186, %s19, 1
        %p188 = scmp.lt.s32.totalorder %s18, 0
        %s189 = scalar_select %p188, %s18, 0
        %s190 = sadd.s32 %s189, %s187
        %s191 = smul.addr %s190, 4
        %s192 = scalar_lea.vmem %s1, %s191
      $region28: #{_lambda_.1} parent=23 // pred_fallthru
        _
      // Predicated region
      $region29: #{_lambda_.1} parent=23 // pred_check
        %p193 = pneg %p94
      $region30: #{_lambda_.1} parent=23 // pred_check_branch
        %195 = sbr.rel (%p193) target = $region32
      $region31: #{_lambda_.1} parent=23 // pred_region
        %p196 = scmp.lt.s32.totalorder %s19, 1
        %s197 = scalar_select %p196, %s19, 1
        %p198 = scmp.lt.s32.totalorder %s18, 0
        %s199 = scalar_select %p198, %s18, 0
        %s200 = sadd.s32 %s199, %s197
        %s201 = smul.addr %s200, 4
        %s202 = scalar_lea.vmem %s2, %s201
      $region32: #{_lambda_.1} parent=23 // pred_fallthru
        _
    $region24: #{_lambda_.1} parent=5 // pred_fallthru
      _
    %p203 = scmp.le.s32.totalorder 1, %s11
    %p204 = scmp.lt.s32.totalorder %s11, 3
    %p205 = pnand %p203, %p204
    %p206 = pneg %p205
    // Predicated region
    $region33: #{_lambda_.1} parent=5 // pred_check
      _
    $region34: #{_lambda_.1} parent=5 // pred_check_branch
      %208 = sbr.rel (%p205) target = $region36
    $region35: #{_lambda_.1} parent=5 // pred_region
      %s209 = ssub.s32 %s11, 1
      %p210 = pneg %p44
      %p211 = pneg %p41
      %p212 = scmp.lt.s32.totalorder %s21, 1
      %s213 = scalar_select %p212, %s21, 1
      %p214 = scmp.lt.s32.totalorder %s20, 0
      %s215 = scalar_select %p214, %s20, 0
      %s216 = sadd.s32 %s215, %s213
      %s217 = smul.addr %s216, 4
      %s218 = scalar_lea.vmem %s1, %s217
      %p219 = pneg %p72
      %p220 = pneg %p69
      %p221 = scmp.lt.s32.totalorder %s21, 1
      %s222 = scalar_select %p221, %s21, 1
      %p223 = scmp.lt.s32.totalorder %s20, 0
      %s224 = scalar_select %p223, %s20, 0
      %s225 = sadd.s32 %s224, %s222
      %s226 = smul.addr %s225, 4
      %s227 = scalar_lea.vmem %s2, %s226
      %p228 = pneg %p100
      %p229 = pneg %p97
      %p230 = scmp.lt.s32.totalorder %s20, 0
      %s231 = scalar_select %p230, %s20, 0
      %s232 = smul.addr %s231, 4
      %s233 = scalar_lea.vmem %s3, %s232
      %p234 = pneg %p126
      %p235 = pneg %p123
      %p236 = pneg %p154
      %p237 = pneg %p151
      %p238 = scmp.lt.s32.totalorder %s21, 1
      %s239 = scalar_select %p238, %s21, 1
      %p240 = scmp.lt.s32.totalorder %s20, 0
      %s241 = scalar_select %p240, %s20, 0
      %s242 = sadd.s32 %s241, %s239
      %s243 = smul.addr %s242, 4
      %s244 = scalar_lea.vmem %s4, %s243
      %p245 = scmp.lt.s32.totalorder %s21, 1
      %s246 = scalar_select %p245, %s21, 1
      %p247 = scmp.lt.s32.totalorder %s20, 0
      %s248 = scalar_select %p247, %s20, 0
      %s249 = sadd.s32 %s248, %s246
      %s250 = smul.addr %s249, 4
      %s251 = scalar_lea.vmem %s1, %s250
      %p252 = scmp.lt.s32.totalorder %s21, 1
      %s253 = scalar_select %p252, %s21, 1
      %p254 = scmp.lt.s32.totalorder %s20, 0
      %s255 = scalar_select %p254, %s20, 0
      %s256 = sadd.s32 %s255, %s253
      %s257 = smul.addr %s256, 4
      %s258 = scalar_lea.vmem %s2, %s257
      %p259 = scmp.lt.s32.totalorder %s20, 0
      %s260 = scalar_select %p259, %s20, 0
      %s261 = smul.addr %s260, 4
      %s262 = scalar_lea.vmem %s3, %s261
      %p263 = scmp.lt.s32.totalorder %s21, 1
      %s264 = scalar_select %p263, %s21, 1
      %p265 = scmp.lt.s32.totalorder %s20, 0
      %s266 = scalar_select %p265, %s20, 0
      %s267 = sadd.s32 %s266, %s264
      %s268 = smul.addr %s267, 4
      %s269 = scalar_lea.vmem %s4, %s268
      %s270 = sld [smem:[#allocation2]]
      %s271 = ssub.f32 1.0, %s270
      %v272 = vld [vmem:[%s251] sm:$0xf]
      %v273 = vld [vmem:[%s262] sm:$0xf]
      %v274 = vstv %s271
      %v275 = vmul.f32 %v274, %v273
      %v276 = vld [vmem:[%s258] sm:$0xf]
      %v277 = vsub.f32 %v276, %v272
      %v278 = vmul.f32 %v275, %v277
      %v279 = vadd.f32 %v272, %v278
      %280 = vst [vmem:[%s269] sm:$0xf] %v279
      %p281 = scmp.lt.s32.totalorder %s21, 1
      %s282 = scalar_select %p281, %s21, 1
      %p283 = scmp.lt.s32.totalorder %s20, 0
      %s284 = scalar_select %p283, %s20, 0
      %s285 = sadd.s32 %s284, %s282
      %s286 = smul.addr %s285, 4
      %s287 = scalar_lea.vmem %s4, %s286
      // Predicated region
      $region37: #{_lambda_.1} parent=35 // pred_check
        %p288 = pneg %p151
      $region38: #{_lambda_.1} parent=35 // pred_check_branch
        %290 = sbr.rel (%p288) target = $region40
      $region39: #{_lambda_.1} parent=35 // pred_region
        _
      $region40: #{_lambda_.1} parent=35 // pred_fallthru
        _
    $region36: #{_lambda_.1} parent=5 // pred_fallthru
      _
    %p291 = scmp.le.s32.totalorder 2, %s11
    // Predicated region
    $region41: #{_lambda_.1} parent=5 // pred_check
      %p292 = pneg %p291
    $region42: #{_lambda_.1} parent=5 // pred_check_branch
      %294 = sbr.rel (%p292) target = $region44
    $region43: #{_lambda_.1} parent=5 // pred_region
      %s295 = ssub.s32 %s11, 2
      // Predicated region
      $region45: #{_lambda_.1} parent=43 // pred_check
        %p296 = pneg %p157
      $region46: #{_lambda_.1} parent=43 // pred_check_branch
        %298 = sbr.rel (%p296) target = $region48
      $region47: #{_lambda_.1} parent=43 // pred_region
        %p299 = scmp.lt.s32.totalorder %s23, 1
        %s300 = scalar_select %p299, %s23, 1
        %p301 = scmp.lt.s32.totalorder %s22, 0
        %s302 = scalar_select %p301, %s22, 0
        %s303 = sadd.s32 %s302, %s300
        %s304 = smul.addr %s303, 4
        %s305 = scalar_lea.vmem %s4, %s304
      $region48: #{_lambda_.1} parent=43 // pred_fallthru
        _
    $region44: #{_lambda_.1} parent=5 // pred_fallthru
      _
  $region6: #{_lambda_.1} parent=0 // loop_footer
    %s15 = sadd.s32 1, %s11
  $region7: #{_lambda_.1} parent=0 // loop_footer_branch
    %10 = sbr.rel target = $region3
  $region8: #{_lambda_.1} parent=0 // loop_exit
    _

</llo_original>
